<compile_context>
chip_gen: v6e
topology: v6e:2x2x1
jax: 0.10.0
libtpu: 0.0.40
codegen_flags: <defaults>
</compile_context>

<pallas_src>
import functools

import jax
import jax.numpy as jnp
from jax.experimental import pallas as pl
from jax.experimental.pallas import tpu as pltpu

LANE = 128                     # vreg lane width: every layer's out-dim padded to this
SUBLANE = 8                    # f32 sublane granularity for the batch tile
TB_MAX = 256                   # batch tile: multiple of 256 (v6e/v7x MXU M) and 128 (v5e)
MATMUL_DTYPE = jnp.bfloat16    # MXU operand dtype (f32 accumulate). jnp.float32 => exact f32.

_SINGLE_BUFFER_OK = None       # feature-probe cache for pipeline_mode=pl.Buffered(1)


def _round_up(x, m):
    return ((x + m - 1) // m) * m


def _mlp_kernel(num_layers, x_ref, *refs):
    """Fused MLP over one batch tile, everything resident in VMEM.

    refs = (w0, b0, w1, b1, ..., w_{L-1}, b_{L-1}, out_ref)
      x_ref : (TB, I)            f32
      w_l   : (in_l, out_l_pad)  MATMUL_DTYPE  (= torch Linear.weight.T, lane-padded)
      b_l   : (1, out_l_pad)     f32           (lane-padded)
      out   : (TB, O_pad)        f32           (lane-dense store)
    """
    out_ref = refs[-1]
    h = x_ref[...]                                        # f32 activations
    for l in range(num_layers):                           # static unroll over layers
        w = refs[2 * l][...]
        b = refs[2 * l + 1][...]
        # bf16 MXU operands, f32 accumulate; bias + ReLU stay f32 (VPU-cheap on v5e).
        h = jnp.dot(h.astype(w.dtype), w, preferred_element_type=jnp.float32) + b
        if l < num_layers - 1:
            h = jnp.maximum(h, 0.0)                       # ReLU (not on the head)
    out_ref[...] = h.astype(out_ref.dtype)                # single lane-dense store


def init_params(key, input_size, hidden_sizes, output_size):
    """PyTorch-style nn.Linear init; weights stored as (in, out) = weight.T."""
    dims = [input_size] + list(hidden_sizes) + [output_size]
    params = []
    for l in range(len(dims) - 1):
        key, kw, kb = jax.random.split(key, 3)
        fan_in, fan_out = dims[l], dims[l + 1]
        k = 1.0 / jnp.sqrt(fan_in)
        w = jax.random.uniform(kw, (fan_in, fan_out), jnp.float32, -k, k)
        b = jax.random.uniform(kb, (fan_out,), jnp.float32, -k, k)
        params.append((w, b))
    return params


def pad_params(params, input_size):
    """One-time, offline lane-padding of all layers.

    Each weight becomes (in_pad, out_pad) with out_pad a multiple of 128 (zero-filled),
    stored in MATMUL_DTYPE; biases become (1, out_pad) f32. Zero columns stay exactly
    zero through bias/ReLU, so downstream layers are unaffected.
    """
    padded = []
    in_dim = input_size                                   # first layer keeps raw input width
    for w, b in params:
        fan_in, fan_out = w.shape
        out_pad = _round_up(fan_out, LANE)
        wp = jnp.zeros((in_dim, out_pad), MATMUL_DTYPE)
        wp = wp.at[:fan_in, :fan_out].set(w.astype(MATMUL_DTYPE))
        bp = jnp.zeros((1, out_pad), jnp.float32).at[:, :fan_out].set(b.astype(jnp.float32))
        padded.append((wp, bp))
        in_dim = out_pad                                  # next layer consumes padded width
    return padded


@functools.partial(jax.jit, static_argnames=("output_size", "single_buffer_weights"))
def _forward(x, padded_params, *, output_size, single_buffer_weights):
    B, I = x.shape
    num_layers = len(padded_params)
    o_pad = padded_params[-1][0].shape[1]
    max_w = max(w.shape[1] for w, _ in padded_params)

    tb = min(TB_MAX, _round_up(B, SUBLANE))               # big batch tile (fills MXU M dim)
    grid = (pl.cdiv(B, tb),)                              # ragged last block; no batch pad

    x = x.astype(jnp.float32)

    def _const_spec(shape):
        # Weights/biases: constant block across the grid -> nothing to pipeline.
        if single_buffer_weights:
            return pl.BlockSpec(shape, lambda i: (0, 0), pipeline_mode=pl.Buffered(1))
        return pl.BlockSpec(shape, lambda i: (0, 0))

    kern_inputs = [x]
    in_specs = [pl.BlockSpec((tb, I), lambda i: (i, 0))]
    flops = 0
    param_bytes = 0
    for w, b in padded_params:
        kern_inputs += [w, b]
        in_specs += [_const_spec(w.shape), _const_spec(b.shape)]
        flops += 2 * B * w.shape[0] * w.shape[1]
        param_bytes += w.size * w.dtype.itemsize + b.size * b.dtype.itemsize

    bytes_accessed = B * I * 4 + param_bytes + B * o_pad * 4

    # Explicit VMEM budget (keeps the design inside v7x's 64 MiB per-TC VMEM):
    # x/out tiles double-buffered, params single- or double-buffered, activation slabs.
    block_bytes = (2 * tb * I * 4
                   + (1 if single_buffer_weights else 2) * param_bytes
                   + 2 * tb * o_pad * 4
                   + (num_layers + 1) * tb * max_w * 4)
    vmem_limit = int(min(64 * 1024 * 1024, max(16 * 1024 * 1024, 2 * block_bytes + (4 << 20))))

    out = pl.pallas_call(
        functools.partial(_mlp_kernel, num_layers),
        out_shape=jax.ShapeDtypeStruct((B, o_pad), jnp.float32),
        grid=grid,
        in_specs=in_specs,
        out_specs=pl.BlockSpec((tb, o_pad), lambda i: (i, 0)),
        compiler_params=pltpu.CompilerParams(
            dimension_semantics=("parallel",),            # batch tiles shard across TCs (v7x)
            vmem_limit_bytes=vmem_limit),
        cost_estimate=pl.CostEstimate(
            flops=int(flops), transcendentals=0, bytes_accessed=int(bytes_accessed)),
    )(*kern_inputs)

    return out[:, :output_size]


def simple_model_forward(x, padded_params, *, output_size):
    """Equivalent of SimpleModel.forward(x). x: (B, input_size); params from pad_params()."""
    global _SINGLE_BUFFER_OK
    if _SINGLE_BUFFER_OK is not False:
        try:
            out = _forward(x, padded_params, output_size=output_size,
                           single_buffer_weights=True)
            _SINGLE_BUFFER_OK = True
            return out
        except Exception:
            # Installed JAX rejects pipeline_mode=pl.Buffered(1): fall back to the
            # default double-buffered constant blocks (correctness identical).
            _SINGLE_BUFFER_OK = False
    return _forward(x, padded_params, output_size=output_size,
                    single_buffer_weights=False)


def _reference_forward_padded(x, padded_params, output_size):
    """Pure-JAX reference mirroring the kernel math (bf16 operands, f32 accumulate)."""
    h = x.astype(jnp.float32)
    n = len(padded_params)
    for l, (w, b) in enumerate(padded_params):
        h = jnp.dot(h.astype(w.dtype), w, preferred_element_type=jnp.float32) + b
        if l < n - 1:
            h = jnp.maximum(h, 0.0)
    return h[:, :output_size]


def _reference_forward_f32(x, params):
    """Pure-JAX f32 reference of the original torch module."""
    h = x.astype(jnp.float32)
    for l, (w, b) in enumerate(params):
        h = h @ w + b
        if l < len(params) - 1:
            h = jnp.maximum(h, 0.0)
    return h


if __name__ == "__main__":
    B = 2
    input_size, hidden_sizes, output_size = 16, (32, 32), 4

    key = jax.random.PRNGKey(0)
    k_x, k_p = jax.random.split(key)
    x = jax.random.normal(k_x, (B, input_size), jnp.float32)
    params = init_params(k_p, input_size, hidden_sizes, output_size)
    padded = pad_params(params, input_size)               # one-time lane-padding + bf16 cast

    out = simple_model_forward(x, padded, output_size=output_size)
    jax.block_until_ready(out)

    assert out.shape == (B, output_size)
    ref = _reference_forward_padded(x, padded, output_size)
    assert jnp.allclose(out, ref, atol=1e-4), "mismatch vs kernel-mirroring reference"
    ref32 = _reference_forward_f32(x, params)
    assert jnp.allclose(out, ref32, atol=5e-2), "mismatch vs f32 reference"

    print("KERNEL_OK")
</pallas_src>

<mosaic_0001>
module attributes {stable_mosaic.version = 11 : i64} {
  func.func @_mlp_kernel(%arg0: i32, %arg1: memref<8x16xf32, #tpu.memory_space<vmem>>, %arg2: memref<16x128xbf16, #tpu.memory_space<vmem>>, %arg3: memref<1x128xf32, #tpu.memory_space<vmem>>, %arg4: memref<128x128xbf16, #tpu.memory_space<vmem>>, %arg5: memref<1x128xf32, #tpu.memory_space<vmem>>, %arg6: memref<128x128xbf16, #tpu.memory_space<vmem>>, %arg7: memref<1x128xf32, #tpu.memory_space<vmem>>, %arg8: memref<8x128xf32, #tpu.memory_space<vmem>>) attributes {dimension_semantics = [#tpu.dimension_semantics<parallel>], iteration_bounds = array<i64: 1>, scalar_prefetch = 0 : i64, scratch_operands = 0 : i64, tpu.core_type = #tpu.core_type<tc>, window_params = [{transform_indices = @transform_0, window_bounds = array<i64: 8, 16>}, {pipeline_mode = #tpu.pipeline_mode<synchronous>, transform_indices = @transform_1, window_bounds = array<i64: 16, 128>}, {pipeline_mode = #tpu.pipeline_mode<synchronous>, transform_indices = @transform_2, window_bounds = array<i64: 1, 128>}, {pipeline_mode = #tpu.pipeline_mode<synchronous>, transform_indices = @transform_3, window_bounds = array<i64: 128, 128>}, {pipeline_mode = #tpu.pipeline_mode<synchronous>, transform_indices = @transform_4, window_bounds = array<i64: 1, 128>}, {pipeline_mode = #tpu.pipeline_mode<synchronous>, transform_indices = @transform_5, window_bounds = array<i64: 128, 128>}, {pipeline_mode = #tpu.pipeline_mode<synchronous>, transform_indices = @transform_6, window_bounds = array<i64: 1, 128>}, {transform_indices = @transform_7, window_bounds = array<i64: 8, 128>}]} {
    %c0 = arith.constant 0 : index
    %c0_0 = arith.constant 0 : index
    %0 = vector.load %arg1[%c0, %c0_0] : memref<8x16xf32, #tpu.memory_space<vmem>>, vector<8x16xf32>
    %c0_1 = arith.constant 0 : index
    %c0_2 = arith.constant 0 : index
    %1 = vector.load %arg2[%c0_1, %c0_2] : memref<16x128xbf16, #tpu.memory_space<vmem>>, vector<16x128xbf16>
    %c0_3 = arith.constant 0 : index
    %c0_4 = arith.constant 0 : index
    %2 = vector.load %arg3[%c0_3, %c0_4] : memref<1x128xf32, #tpu.memory_space<vmem>>, vector<1x128xf32>
    %3 = arith.truncf %0 : vector<8x16xf32> to vector<8x16xbf16>
    %cst = arith.constant dense<0.000000e+00> : vector<8x128xf32>
    %4 = tpu.matmul %3, %1, %cst {dimension_numbers = #tpu.dot_dimension_numbers<[1], [0], [0], [1], [0, 0, 1, 1], [], []>} : vector<8x16xbf16>, vector<16x128xbf16>, vector<8x128xf32> -> vector<8x128xf32>
    %5 = vector.broadcast %2 : vector<1x128xf32> to vector<8x128xf32>
    %6 = arith.addf %4, %5 : vector<8x128xf32>
    %cst_5 = arith.constant 0.000000e+00 : f32
    %7 = vector.broadcast %cst_5 : f32 to vector<8x128xf32>
    %8 = arith.maximumf %6, %7 : vector<8x128xf32>
    %c0_6 = arith.constant 0 : index
    %c0_7 = arith.constant 0 : index
    %9 = vector.load %arg4[%c0_6, %c0_7] : memref<128x128xbf16, #tpu.memory_space<vmem>>, vector<128x128xbf16>
    %c0_8 = arith.constant 0 : index
    %c0_9 = arith.constant 0 : index
    %10 = vector.load %arg5[%c0_8, %c0_9] : memref<1x128xf32, #tpu.memory_space<vmem>>, vector<1x128xf32>
    %11 = arith.truncf %8 : vector<8x128xf32> to vector<8x128xbf16>
    %cst_10 = arith.constant dense<0.000000e+00> : vector<8x128xf32>
    %12 = tpu.matmul %11, %9, %cst_10 {dimension_numbers = #tpu.dot_dimension_numbers<[1], [0], [0], [1], [0, 0, 1, 1], [], []>} : vector<8x128xbf16>, vector<128x128xbf16>, vector<8x128xf32> -> vector<8x128xf32>
    %13 = vector.broadcast %10 : vector<1x128xf32> to vector<8x128xf32>
    %14 = arith.addf %12, %13 : vector<8x128xf32>
    %cst_11 = arith.constant 0.000000e+00 : f32
    %15 = vector.broadcast %cst_11 : f32 to vector<8x128xf32>
    %16 = arith.maximumf %14, %15 : vector<8x128xf32>
    %c0_12 = arith.constant 0 : index
    %c0_13 = arith.constant 0 : index
    %17 = vector.load %arg6[%c0_12, %c0_13] : memref<128x128xbf16, #tpu.memory_space<vmem>>, vector<128x128xbf16>
    %c0_14 = arith.constant 0 : index
    %c0_15 = arith.constant 0 : index
    %18 = vector.load %arg7[%c0_14, %c0_15] : memref<1x128xf32, #tpu.memory_space<vmem>>, vector<1x128xf32>
    %19 = arith.truncf %16 : vector<8x128xf32> to vector<8x128xbf16>
    %cst_16 = arith.constant dense<0.000000e+00> : vector<8x128xf32>
    %20 = tpu.matmul %19, %17, %cst_16 {dimension_numbers = #tpu.dot_dimension_numbers<[1], [0], [0], [1], [0, 0, 1, 1], [], []>} : vector<8x128xbf16>, vector<128x128xbf16>, vector<8x128xf32> -> vector<8x128xf32>
    %21 = vector.broadcast %18 : vector<1x128xf32> to vector<8x128xf32>
    %22 = arith.addf %20, %21 : vector<8x128xf32>
    %c0_17 = arith.constant 0 : index
    %c0_18 = arith.constant 0 : index
    %23 = vector.load %arg8[%c0_17, %c0_18] : memref<8x128xf32, #tpu.memory_space<vmem>>, vector<8x128xf32>
    tpu.vector_store %arg8[%c0_17, %c0_18], %22 {strides = array<i32>} : memref<8x128xf32, #tpu.memory_space<vmem>>, vector<8x128xf32>,
    return
  }
  func.func @transform_0(%arg0: i32) -> (i32, i32) {
    %c0_i32 = arith.constant 0 : i32
    %c0_i32_0 = arith.constant 0 : i32
    return %arg0, %c0_i32 : i32, i32
  }
  func.func @transform_1(%arg0: i32) -> (i32, i32) {
    %c0_i32 = arith.constant 0 : i32
    %c0_i32_0 = arith.constant 0 : i32
    %c0_i32_1 = arith.constant 0 : i32
    return %c0_i32, %c0_i32_0 : i32, i32
  }
  func.func @transform_2(%arg0: i32) -> (i32, i32) {
    %c0_i32 = arith.constant 0 : i32
    %c0_i32_0 = arith.constant 0 : i32
    %c0_i32_1 = arith.constant 0 : i32
    return %c0_i32, %c0_i32_0 : i32, i32
  }
  func.func @transform_3(%arg0: i32) -> (i32, i32) {
    %c0_i32 = arith.constant 0 : i32
    %c0_i32_0 = arith.constant 0 : i32
    %c0_i32_1 = arith.constant 0 : i32
    return %c0_i32, %c0_i32_0 : i32, i32
  }
  func.func @transform_4(%arg0: i32) -> (i32, i32) {
    %c0_i32 = arith.constant 0 : i32
    %c0_i32_0 = arith.constant 0 : i32
    %c0_i32_1 = arith.constant 0 : i32
    return %c0_i32, %c0_i32_0 : i32, i32
  }
  func.func @transform_5(%arg0: i32) -> (i32, i32) {
    %c0_i32 = arith.constant 0 : i32
    %c0_i32_0 = arith.constant 0 : i32
    %c0_i32_1 = arith.constant 0 : i32
    return %c0_i32, %c0_i32_0 : i32, i32
  }
  func.func @transform_6(%arg0: i32) -> (i32, i32) {
    %c0_i32 = arith.constant 0 : i32
    %c0_i32_0 = arith.constant 0 : i32
    %c0_i32_1 = arith.constant 0 : i32
    return %c0_i32, %c0_i32_0 : i32, i32
  }
  func.func @transform_7(%arg0: i32) -> (i32, i32) {
    %c0_i32 = arith.constant 0 : i32
    %c0_i32_0 = arith.constant 0 : i32
    return %arg0, %c0_i32 : i32, i32
  }
}

module attributes {stable_mosaic.version = 11 : i64} {
  func.func @_mlp_kernel(%arg0: i32, %arg1: memref<8x16xf32, #tpu.memory_space<vmem>>, %arg2: memref<16x128xbf16, #tpu.memory_space<vmem>>, %arg3: memref<1x128xf32, #tpu.memory_space<vmem>>, %arg4: memref<128x128xbf16, #tpu.memory_space<vmem>>, %arg5: memref<1x128xf32, #tpu.memory_space<vmem>>, %arg6: memref<128x128xbf16, #tpu.memory_space<vmem>>, %arg7: memref<1x128xf32, #tpu.memory_space<vmem>>, %arg8: memref<8x128xf32, #tpu.memory_space<vmem>>) attributes {dimension_semantics = [#tpu.dimension_semantics<parallel>], iteration_bounds = array<i64: 1>, scalar_prefetch = 0 : i64, scratch_operands = 0 : i64, tpu.core_type = #tpu.core_type<tc>, window_params = [{transform_indices = @transform_0, window_bounds = array<i64: 8, 16>}, {pipeline_mode = #tpu.pipeline_mode<synchronous>, transform_indices = @transform_1, window_bounds = array<i64: 16, 128>}, {pipeline_mode = #tpu.pipeline_mode<synchronous>, transform_indices = @transform_2, window_bounds = array<i64: 1, 128>}, {pipeline_mode = #tpu.pipeline_mode<synchronous>, transform_indices = @transform_3, window_bounds = array<i64: 128, 128>}, {pipeline_mode = #tpu.pipeline_mode<synchronous>, transform_indices = @transform_4, window_bounds = array<i64: 1, 128>}, {pipeline_mode = #tpu.pipeline_mode<synchronous>, transform_indices = @transform_5, window_bounds = array<i64: 128, 128>}, {pipeline_mode = #tpu.pipeline_mode<synchronous>, transform_indices = @transform_6, window_bounds = array<i64: 1, 128>}, {transform_indices = @transform_7, window_bounds = array<i64: 8, 128>}]} {
    %c0 = arith.constant 0 : index
    %c0_0 = arith.constant 0 : index
    %0 = vector.load %arg1[%c0, %c0_0] : memref<8x16xf32, #tpu.memory_space<vmem>>, vector<8x16xf32>
    %c0_1 = arith.constant 0 : index
    %c0_2 = arith.constant 0 : index
    %1 = vector.load %arg2[%c0_1, %c0_2] : memref<16x128xbf16, #tpu.memory_space<vmem>>, vector<16x128xbf16>
    %c0_3 = arith.constant 0 : index
    %c0_4 = arith.constant 0 : index
    %2 = vector.load %arg3[%c0_3, %c0_4] : memref<1x128xf32, #tpu.memory_space<vmem>>, vector<1x128xf32>
    %3 = arith.truncf %0 : vector<8x16xf32> to vector<8x16xbf16>
    %cst = arith.constant dense<0.000000e+00> : vector<8x128xf32>
    %4 = tpu.matmul %3, %1, %cst {dimension_numbers = #tpu.dot_dimension_numbers<[1], [0], [0], [1], [0, 0, 1, 1], [], []>} : vector<8x16xbf16>, vector<16x128xbf16>, vector<8x128xf32> -> vector<8x128xf32>
    %5 = vector.broadcast %2 : vector<1x128xf32> to vector<8x128xf32>
    %6 = arith.addf %4, %5 : vector<8x128xf32>
    %cst_5 = arith.constant 0.000000e+00 : f32
    %7 = vector.broadcast %cst_5 : f32 to vector<8x128xf32>
    %8 = arith.maximumf %6, %7 : vector<8x128xf32>
    %c0_6 = arith.constant 0 : index
    %c0_7 = arith.constant 0 : index
    %9 = vector.load %arg4[%c0_6, %c0_7] : memref<128x128xbf16, #tpu.memory_space<vmem>>, vector<128x128xbf16>
    %c0_8 = arith.constant 0 : index
    %c0_9 = arith.constant 0 : index
    %10 = vector.load %arg5[%c0_8, %c0_9] : memref<1x128xf32, #tpu.memory_space<vmem>>, vector<1x128xf32>
    %11 = arith.truncf %8 : vector<8x128xf32> to vector<8x128xbf16>
    %cst_10 = arith.constant dense<0.000000e+00> : vector<8x128xf32>
    %12 = tpu.matmul %11, %9, %cst_10 {dimension_numbers = #tpu.dot_dimension_numbers<[1], [0], [0], [1], [0, 0, 1, 1], [], []>} : vector<8x128xbf16>, vector<128x128xbf16>, vector<8x128xf32> -> vector<8x128xf32>
    %13 = vector.broadcast %10 : vector<1x128xf32> to vector<8x128xf32>
    %14 = arith.addf %12, %13 : vector<8x128xf32>
    %cst_11 = arith.constant 0.000000e+00 : f32
    %15 = vector.broadcast %cst_11 : f32 to vector<8x128xf32>
    %16 = arith.maximumf %14, %15 : vector<8x128xf32>
    %c0_12 = arith.constant 0 : index
    %c0_13 = arith.constant 0 : index
    %17 = vector.load %arg6[%c0_12, %c0_13] : memref<128x128xbf16, #tpu.memory_space<vmem>>, vector<128x128xbf16>
    %c0_14 = arith.constant 0 : index
    %c0_15 = arith.constant 0 : index
    %18 = vector.load %arg7[%c0_14, %c0_15] : memref<1x128xf32, #tpu.memory_space<vmem>>, vector<1x128xf32>
    %19 = arith.truncf %16 : vector<8x128xf32> to vector<8x128xbf16>
    %cst_16 = arith.constant dense<0.000000e+00> : vector<8x128xf32>
    %20 = tpu.matmul %19, %17, %cst_16 {dimension_numbers = #tpu.dot_dimension_numbers<[1], [0], [0], [1], [0, 0, 1, 1], [], []>} : vector<8x128xbf16>, vector<128x128xbf16>, vector<8x128xf32> -> vector<8x128xf32>
    %21 = vector.broadcast %18 : vector<1x128xf32> to vector<8x128xf32>
    %22 = arith.addf %20, %21 : vector<8x128xf32>
    %c0_17 = arith.constant 0 : index
    %c0_18 = arith.constant 0 : index
    %23 = vector.load %arg8[%c0_17, %c0_18] : memref<8x128xf32, #tpu.memory_space<vmem>>, vector<8x128xf32>
    tpu.vector_store %arg8[%c0_17, %c0_18], %22 {strides = array<i32>} : memref<8x128xf32, #tpu.memory_space<vmem>>, vector<8x128xf32>,
    return
  }
  func.func @transform_0(%arg0: i32) -> (i32, i32) {
    %c0_i32 = arith.constant 0 : i32
    %c0_i32_0 = arith.constant 0 : i32
    return %arg0, %c0_i32 : i32, i32
  }
  func.func @transform_1(%arg0: i32) -> (i32, i32) {
    %c0_i32 = arith.constant 0 : i32
    %c0_i32_0 = arith.constant 0 : i32
    %c0_i32_1 = arith.constant 0 : i32
    return %c0_i32, %c0_i32_0 : i32, i32
  }
  func.func @transform_2(%arg0: i32) -> (i32, i32) {
    %c0_i32 = arith.constant 0 : i32
    %c0_i32_0 = arith.constant 0 : i32
    %c0_i32_1 = arith.constant 0 : i32
    return %c0_i32, %c0_i32_0 : i32, i32
  }
  func.func @transform_3(%arg0: i32) -> (i32, i32) {
    %c0_i32 = arith.constant 0 : i32
    %c0_i32_0 = arith.constant 0 : i32
    %c0_i32_1 = arith.constant 0 : i32
    return %c0_i32, %c0_i32_0 : i32, i32
  }
  func.func @transform_4(%arg0: i32) -> (i32, i32) {
    %c0_i32 = arith.constant 0 : i32
    %c0_i32_0 = arith.constant 0 : i32
    %c0_i32_1 = arith.constant 0 : i32
    return %c0_i32, %c0_i32_0 : i32, i32
  }
  func.func @transform_5(%arg0: i32) -> (i32, i32) {
    %c0_i32 = arith.constant 0 : i32
    %c0_i32_0 = arith.constant 0 : i32
    %c0_i32_1 = arith.constant 0 : i32
    return %c0_i32, %c0_i32_0 : i32, i32
  }
  func.func @transform_6(%arg0: i32) -> (i32, i32) {
    %c0_i32 = arith.constant 0 : i32
    %c0_i32_0 = arith.constant 0 : i32
    %c0_i32_1 = arith.constant 0 : i32
    return %c0_i32, %c0_i32_0 : i32, i32
  }
  func.func @transform_7(%arg0: i32) -> (i32, i32) {
    %c0_i32 = arith.constant 0 : i32
    %c0_i32_0 = arith.constant 0 : i32
    return %arg0, %c0_i32 : i32, i32
  }
}

</mosaic_0001>

<llo_original>
// kernel: _forward.1
$region0: #{_forward.1}
  #allocation0 [shape = 'u32[]', space=smem, size = 0x4, offset = 0x4, fixed_abs, tag = 'smem constant byte address 0x4 - core index']
  #allocation1 [shape = 'u32[144,128]{1,0:T(1,128)}', space=vmem, size = 0x12000, scoped, tag = 'internal scratch']
  %s0 = inlined_call_operand.hbm [shape: f32[2,16], index: 0, kind: input, shape index: {}]
  %s1 = inlined_call_operand.hbm [shape: bf16[16,128], index: 1, kind: input, shape index: {}]
  %s2 = inlined_call_operand.vmem [shape: f32[1,128], index: 2, kind: input, shape index: {}]
  %s3 = inlined_call_operand.hbm [shape: bf16[128,128], index: 3, kind: input, shape index: {}]
  %s4 = inlined_call_operand.vmem [shape: f32[1,128], index: 4, kind: input, shape index: {}]
  %s5 = inlined_call_operand.hbm [shape: bf16[128,128], index: 5, kind: input, shape index: {}]
  %s6 = inlined_call_operand.vmem [shape: f32[1,128], index: 6, kind: input, shape index: {}]
  %s7 = inlined_call_operand.hbm [shape: f32[2,128], index: 7, kind: output, shape index: {}]
  %s8 = sld [smem:[#allocation0]]
  $region54: #{_forward.1} parent=0
    _
  %s10 = ssub.s32 1, %s8
  %s11 = scalar_select 0, %s10, %s8
  $region1: #{_forward.1} parent=0
    #allocation2 [shape = 'u8[4096]{0}', space=vmem, size = 0x1000, scoped, tag = 'input window, operand 0, single buffered']
    #allocation3 [shape = 's32[1]{0}', space=sflag, size = 0x4, scoped, tag = 'scoped memory for _forward.1']
    #allocation4 [shape = 's32[1]{0}', space=sflag, size = 0x4, scoped, tag = 'scoped memory for _forward.1']
    #allocation5 [shape = 'u8[4096]{0}', space=vmem, size = 0x1000, scoped, tag = 'input window, operand 1, single buffered']
    #allocation6 [shape = 's32[1]{0}', space=sflag, size = 0x4, scoped, tag = 'scoped memory for _forward.1']
    #allocation7 [shape = 'u8[32768]{0}', space=vmem, size = 0x8000, scoped, tag = 'input window, operand 3, single buffered']
    #allocation8 [shape = 'u8[32768]{0}', space=vmem, size = 0x8000, scoped, tag = 'input window, operand 5, single buffered']
    #allocation9 [shape = 's32[1]{0}', space=sflag, size = 0x4, scoped, tag = 'scoped memory for _forward.1']
    #allocation10 [shape = 'u8[4096]{0}', space=vmem, size = 0x1000, scoped, tag = 'output window, operand 0, single buffered']
    %12 = vsyncpa [#allocation3], 0
    %13 = vsyncpa [#allocation6], 0
    %14 = vsyncpa [#allocation9], 0
    %15 = vsyncpa [#allocation4], 0
    // Predicated region
    $region2: #{_forward.1} parent=1 // pred_check
      _
    $region3: #{_forward.1} parent=1 // pred_check_branch
      %17 = sbr.rel (0) target = $region5
    $region4: #{_forward.1} parent=1 // pred_region
      %s19 = ssub.s32 128, 32
      %20 = vsyncadd [#allocation3], %s19
      %s21 = sshll.u32 [#allocation2], 4
      %s22 = int_to_ptr.vmem [resolvable:$true] %s21
      %27 = dma.hbm_to_vmem [thread:$0]  %s0, 32, %s22, [#allocation3], 32, 32, 2
    $region5: #{_forward.1} parent=1 // pred_fallthru
      _
    // Predicated region
    $region6: #{_forward.1} parent=1 // pred_check
      _
    $region7: #{_forward.1} parent=1 // pred_check_branch
      %29 = sbr.rel (0) target = $region9
    $region8: #{_forward.1} parent=1 // pred_region
      %s31 = ssub.s32 128, 128
      %32 = vsyncadd [#allocation6], %s31
      %s33 = sshll.u32 [#allocation5], 4
      %s34 = int_to_ptr.vmem [resolvable:$true] %s33
      %39 = dma.hbm_to_vmem [thread:$0]  %s1, 128, %s34, [#allocation6], 64, 64, 4
    $region9: #{_forward.1} parent=1 // pred_fallthru
      _
    // Predicated region
    $region10: #{_forward.1} parent=1 // pred_check
      _
    $region11: #{_forward.1} parent=1 // pred_check_branch
      %41 = sbr.rel (0) target = $region13
    $region12: #{_forward.1} parent=1 // pred_region
      _
    $region13: #{_forward.1} parent=1 // pred_fallthru
      _
    // Predicated region
    $region14: #{_forward.1} parent=1 // pred_check
      _
    $region15: #{_forward.1} parent=1 // pred_check_branch
      %43 = sbr.rel (0) target = $region17
    $region16: #{_forward.1} parent=1 // pred_region
      %s45 = ssub.s32 1024, 1024
      %46 = vsyncadd [#allocation6], %s45
      %s47 = sshll.u32 [#allocation7], 4
      %s48 = int_to_ptr.vmem [resolvable:$true] %s47
      %53 = dma.hbm_to_vmem [thread:$0]  %s3, 1024, %s48, [#allocation6], 64, 64, 4
    $region17: #{_forward.1} parent=1 // pred_fallthru
      _
    // Predicated region
    $region18: #{_forward.1} parent=1 // pred_check
      _
    $region19: #{_forward.1} parent=1 // pred_check_branch
      %55 = sbr.rel (0) target = $region21
    $region20: #{_forward.1} parent=1 // pred_region
      _
    $region21: #{_forward.1} parent=1 // pred_fallthru
      _
    // Predicated region
    $region22: #{_forward.1} parent=1 // pred_check
      _
    $region23: #{_forward.1} parent=1 // pred_check_branch
      %57 = sbr.rel (0) target = $region25
    $region24: #{_forward.1} parent=1 // pred_region
      %s59 = ssub.s32 1024, 1024
      %60 = vsyncadd [#allocation9], %s59
      %s61 = sshll.u32 [#allocation8], 4
      %s62 = int_to_ptr.vmem [resolvable:$true] %s61
      %67 = dma.hbm_to_vmem [thread:$0]  %s5, 1024, %s62, [#allocation9], 64, 64, 4
    $region25: #{_forward.1} parent=1 // pred_fallthru
      _
    // Predicated region
    $region26: #{_forward.1} parent=1 // pred_check
      _
    $region27: #{_forward.1} parent=1 // pred_check_branch
      %69 = sbr.rel (0) target = $region29
    $region28: #{_forward.1} parent=1 // pred_region
      _
    $region29: #{_forward.1} parent=1 // pred_fallthru
      _
    // Predicated region
    $region30: #{_forward.1} parent=1 // pred_check
      _
    $region31: #{_forward.1} parent=1 // pred_check_branch
      %71 = sbr.rel (0) target = $region33
    $region32: #{_forward.1} parent=1 // pred_region
      %72 = dma.done [#allocation3], 128
    $region33: #{_forward.1} parent=1 // pred_fallthru
      _
    // Predicated region
    $region34: #{_forward.1} parent=1 // pred_check
      _
    $region35: #{_forward.1} parent=1 // pred_check_branch
      %74 = sbr.rel (0) target = $region37
    $region36: #{_forward.1} parent=1 // pred_region
      %75 = dma.done [#allocation6], 128
    $region37: #{_forward.1} parent=1 // pred_fallthru
      _
    // Predicated region
    $region38: #{_forward.1} parent=1 // pred_check
      _
    $region39: #{_forward.1} parent=1 // pred_check_branch
      %77 = sbr.rel (0) target = $region41
    $region40: #{_forward.1} parent=1 // pred_region
      %78 = dma.done [#allocation6], 1024
    $region41: #{_forward.1} parent=1 // pred_fallthru
      _
    // Predicated region
    $region42: #{_forward.1} parent=1 // pred_check
      _
    $region43: #{_forward.1} parent=1 // pred_check_branch
      %80 = sbr.rel (0) target = $region45
    $region44: #{_forward.1} parent=1 // pred_region
      %81 = dma.done [#allocation9], 1024
    $region45: #{_forward.1} parent=1 // pred_fallthru
      _
    %v83 = vld [vmem:[#allocation2] sm:$0xff]
    %v84 = vld [vmem:[#allocation5] sm:$0xf]
    %v85 = vld [vmem:[#allocation5 + $0x4] sm:$0xf]
    %v86 = vld [vmem:[%s2] sm:$0x1]
    %v87 = vpack.c.bf16 %v83, %v83
    %v89 = vlaneseq
    %v90 = vshrl.u32 %v89, 7
    %v91 = vsub.s32 0, %v90
    %v92 = vrot.slane %v86, %v91
    %v96 = vunpack.c.l.b16 %v84
    %v97 = vunpack.c.l.b16 %v85
    %v98 = vpack.c.b16 %v97, %v96
    %vm100 = vcmask 130048
    %v102 = vsel %vm100, %v87, 0
    %104 = vmatprep.subr.bf16.mxu0 0
    %105 = vmatpush1.bf16.msra.mxu0 0
    %106 = vmatprep.subr.bf16.mxu0 0
    %107 = vmatpush1.bf16.msra.mxu0 0
    %108 = vmatprep.subr.bf16.mxu0 0
    %109 = vmatpush1.bf16.msra.mxu0 0
    %110 = vmatprep.subr.bf16.mxu0 0
    %111 = vmatpush1.bf16.msra.mxu0 0
    %112 = vmatprep.subr.bf16.mxu0 0
    %113 = vmatpush1.bf16.msra.mxu0 0
    %114 = vmatprep.subr.bf16.mxu0 0
    %115 = vmatpush1.bf16.msra.mxu0 0
    %116 = vmatprep.subr.bf16.mxu0 0
    %117 = vmatpush1.bf16.msra.mxu0 0
    %118 = vmatprep.subr.bf16.mxu0 0
    %119 = vmatpush1.bf16.msra.mxu0 %v98
    %120 = vmatprep.subr.bf16.mxu0 0
    %121 = vmatpush2.bf16.msra.mxu0 0
    %122 = vmatprep.subr.bf16.mxu0 0
    %123 = vmatpush2.bf16.msra.mxu0 0
    %124 = vmatprep.subr.bf16.mxu0 0
    %125 = vmatpush2.bf16.msra.mxu0 0
    %126 = vmatprep.subr.bf16.mxu0 0
    %127 = vmatpush2.bf16.msra.mxu0 0
    %128 = vmatprep.subr.bf16.mxu0 0
    %129 = vmatpush2.bf16.msra.mxu0 0
    %130 = vmatprep.subr.bf16.mxu0 0
    %131 = vmatpush2.bf16.msra.mxu0 0
    %132 = vmatprep.subr.bf16.mxu0 0
    %133 = vmatpush2.bf16.msra.mxu0 0
    %134 = vmatprep.subr.bf16.mxu0 0
    %135 = vmatpush2.bf16.msra.mxu0 0
    %136 = vmatprep.mubr.bf16.mxu0 0
    %137 = vmatmul.mubr.bf16.gmra.mxu0 %v102
    %v138 = vpop.f32.mrf.mxu0
    %v139 = vadd.f32 %v92, %v138
    %v140 = vpop.f32.mrf.mxu0
    %v141 = vpop.f32.mrf.mxu0
    %v142 = vpop.f32.mrf.mxu0
    %143 = vdwg.mxu0
    %v144 = vmax.f32 %v139, 0.0
    %v145 = vld [vmem:[#allocation7] sm:$0xf]
    %v146 = vld [vmem:[#allocation7 + $0x4] sm:$0xf]
    %v147 = vld [vmem:[#allocation7 + $0x8] sm:$0xf]
    %v148 = vld [vmem:[#allocation7 + $0xc] sm:$0xf]
    %v149 = vld [vmem:[#allocation7 + $0x10] sm:$0xf]
    %v150 = vld [vmem:[#allocation7 + $0x14] sm:$0xf]
    %v151 = vld [vmem:[#allocation7 + $0x18] sm:$0xf]
    %v152 = vld [vmem:[#allocation7 + $0x1c] sm:$0xf]
    %v153 = vld [vmem:[#allocation7 + $0x20] sm:$0xf]
    %v154 = vld [vmem:[#allocation7 + $0x24] sm:$0xf]
    %v155 = vld [vmem:[#allocation7 + $0x28] sm:$0xf]
    %v156 = vld [vmem:[#allocation7 + $0x2c] sm:$0xf]
    %v157 = vld [vmem:[#allocation7 + $0x30] sm:$0xf]
    %v158 = vld [vmem:[#allocation7 + $0x34] sm:$0xf]
    %v159 = vld [vmem:[#allocation7 + $0x38] sm:$0xf]
    %v160 = vld [vmem:[#allocation7 + $0x3c] sm:$0xf]
    %v161 = vld [vmem:[%s4] sm:$0x1]
    %v162 = vpack.c.bf16 %v144, %v144
    %v164 = vlaneseq
    %v165 = vshrl.u32 %v164, 7
    %v166 = vsub.s32 0, %v165
    %v167 = vrot.slane %v161, %v166
    %v185 = vunpack.c.l.b16 %v145
    %v186 = vunpack.c.l.b16 %v146
    %v187 = vunpack.c.l.b16 %v147
    %v188 = vunpack.c.l.b16 %v148
    %v189 = vunpack.c.l.b16 %v149
    %v190 = vunpack.c.l.b16 %v150
    %v191 = vunpack.c.l.b16 %v151
    %v192 = vunpack.c.l.b16 %v152
    %v193 = vunpack.c.l.b16 %v153
    %v194 = vunpack.c.l.b16 %v154
    %v195 = vunpack.c.l.b16 %v155
    %v196 = vunpack.c.l.b16 %v156
    %v197 = vunpack.c.l.b16 %v157
    %v198 = vunpack.c.l.b16 %v158
    %v199 = vunpack.c.l.b16 %v159
    %v200 = vunpack.c.l.b16 %v160
    %v201 = vpack.c.b16 %v186, %v185
    %v202 = vpack.c.b16 %v188, %v187
    %v203 = vpack.c.b16 %v190, %v189
    %v204 = vpack.c.b16 %v192, %v191
    %v205 = vpack.c.b16 %v194, %v193
    %v206 = vpack.c.b16 %v196, %v195
    %v207 = vpack.c.b16 %v198, %v197
    %v208 = vpack.c.b16 %v200, %v199
    %217 = vmatprep.subr.bf16.mxu0 0
    %218 = vmatpush1.bf16.msra.mxu0 %v208
    %219 = vmatprep.subr.bf16.mxu0 0
    %220 = vmatpush1.bf16.msra.mxu0 %v207
    %221 = vmatprep.subr.bf16.mxu0 0
    %222 = vmatpush1.bf16.msra.mxu0 %v206
    %223 = vmatprep.subr.bf16.mxu0 0
    %224 = vmatpush1.bf16.msra.mxu0 %v205
    %225 = vmatprep.subr.bf16.mxu0 0
    %226 = vmatpush1.bf16.msra.mxu0 %v204
    %227 = vmatprep.subr.bf16.mxu0 0
    %228 = vmatpush1.bf16.msra.mxu0 %v203
    %229 = vmatprep.subr.bf16.mxu0 0
    %230 = vmatpush1.bf16.msra.mxu0 %v202
    %231 = vmatprep.subr.bf16.mxu0 0
    %232 = vmatpush1.bf16.msra.mxu0 %v201
    %233 = vmatprep.subr.bf16.mxu0 0
    %234 = vmatpush2.bf16.msra.mxu0 0
    %235 = vmatprep.subr.bf16.mxu0 0
    %236 = vmatpush2.bf16.msra.mxu0 0
    %237 = vmatprep.subr.bf16.mxu0 0
    %238 = vmatpush2.bf16.msra.mxu0 0
    %239 = vmatprep.subr.bf16.mxu0 0
    %240 = vmatpush2.bf16.msra.mxu0 0
    %241 = vmatprep.subr.bf16.mxu0 0
    %242 = vmatpush2.bf16.msra.mxu0 0
    %243 = vmatprep.subr.bf16.mxu0 0
    %244 = vmatpush2.bf16.msra.mxu0 0
    %245 = vmatprep.subr.bf16.mxu0 0
    %246 = vmatpush2.bf16.msra.mxu0 0
    %247 = vmatprep.subr.bf16.mxu0 0
    %248 = vmatpush2.bf16.msra.mxu0 0
    %249 = vmatprep.mubr.bf16.mxu0 0
    %250 = vmatmul.mubr.bf16.gmra.mxu0 %v162
    %v251 = vpop.f32.mrf.mxu0
    %v252 = vadd.f32 %v167, %v251
    %v253 = vpop.f32.mrf.mxu0
    %v254 = vpop.f32.mrf.mxu0
    %v255 = vpop.f32.mrf.mxu0
    %256 = vdwg.mxu0
    %v257 = vmax.f32 %v252, 0.0
    %v258 = vld [vmem:[#allocation8] sm:$0xf]
    %v259 = vld [vmem:[#allocation8 + $0x4] sm:$0xf]
    %v260 = vld [vmem:[#allocation8 + $0x8] sm:$0xf]
    %v261 = vld [vmem:[#allocation8 + $0xc] sm:$0xf]
    %v262 = vld [vmem:[#allocation8 + $0x10] sm:$0xf]
    %v263 = vld [vmem:[#allocation8 + $0x14] sm:$0xf]
    %v264 = vld [vmem:[#allocation8 + $0x18] sm:$0xf]
    %v265 = vld [vmem:[#allocation8 + $0x1c] sm:$0xf]
    %v266 = vld [vmem:[#allocation8 + $0x20] sm:$0xf]
    %v267 = vld [vmem:[#allocation8 + $0x24] sm:$0xf]
    %v268 = vld [vmem:[#allocation8 + $0x28] sm:$0xf]
    %v269 = vld [vmem:[#allocation8 + $0x2c] sm:$0xf]
    %v270 = vld [vmem:[#allocation8 + $0x30] sm:$0xf]
    %v271 = vld [vmem:[#allocation8 + $0x34] sm:$0xf]
    %v272 = vld [vmem:[#allocation8 + $0x38] sm:$0xf]
    %v273 = vld [vmem:[#allocation8 + $0x3c] sm:$0xf]
    %v274 = vld [vmem:[%s6] sm:$0x1]
    %v275 = vpack.c.bf16 %v257, %v257
    %v277 = vlaneseq
    %v278 = vshrl.u32 %v277, 7
    %v279 = vsub.s32 0, %v278
    %v280 = vrot.slane %v274, %v279
    %v298 = vunpack.c.l.b16 %v258
    %v299 = vunpack.c.l.b16 %v259
    %v300 = vunpack.c.l.b16 %v260
    %v301 = vunpack.c.l.b16 %v261
    %v302 = vunpack.c.l.b16 %v262
    %v303 = vunpack.c.l.b16 %v263
    %v304 = vunpack.c.l.b16 %v264
    %v305 = vunpack.c.l.b16 %v265
    %v306 = vunpack.c.l.b16 %v266
    %v307 = vunpack.c.l.b16 %v267
    %v308 = vunpack.c.l.b16 %v268
    %v309 = vunpack.c.l.b16 %v269
    %v310 = vunpack.c.l.b16 %v270
    %v311 = vunpack.c.l.b16 %v271
    %v312 = vunpack.c.l.b16 %v272
    %v313 = vunpack.c.l.b16 %v273
    %v314 = vpack.c.b16 %v299, %v298
    %v315 = vpack.c.b16 %v301, %v300
    %v316 = vpack.c.b16 %v303, %v302
    %v317 = vpack.c.b16 %v305, %v304
    %v318 = vpack.c.b16 %v307, %v306
    %v319 = vpack.c.b16 %v309, %v308
    %v320 = vpack.c.b16 %v311, %v310
    %v321 = vpack.c.b16 %v313, %v312
    %330 = vmatprep.subr.bf16.mxu0 0
    %331 = vmatpush1.bf16.msra.mxu0 %v321
    %332 = vmatprep.subr.bf16.mxu0 0
    %333 = vmatpush1.bf16.msra.mxu0 %v320
    %334 = vmatprep.subr.bf16.mxu0 0
    %335 = vmatpush1.bf16.msra.mxu0 %v319
    %336 = vmatprep.subr.bf16.mxu0 0
    %337 = vmatpush1.bf16.msra.mxu0 %v318
    %338 = vmatprep.subr.bf16.mxu0 0
    %339 = vmatpush1.bf16.msra.mxu0 %v317
    %340 = vmatprep.subr.bf16.mxu0 0
    %341 = vmatpush1.bf16.msra.mxu0 %v316
    %342 = vmatprep.subr.bf16.mxu0 0
    %343 = vmatpush1.bf16.msra.mxu0 %v315
    %344 = vmatprep.subr.bf16.mxu0 0
    %345 = vmatpush1.bf16.msra.mxu0 %v314
    %346 = vmatprep.subr.bf16.mxu0 0
    %347 = vmatpush2.bf16.msra.mxu0 0
    %348 = vmatprep.subr.bf16.mxu0 0
    %349 = vmatpush2.bf16.msra.mxu0 0
    %350 = vmatprep.subr.bf16.mxu0 0
    %351 = vmatpush2.bf16.msra.mxu0 0
    %352 = vmatprep.subr.bf16.mxu0 0
    %353 = vmatpush2.bf16.msra.mxu0 0
    %354 = vmatprep.subr.bf16.mxu0 0
    %355 = vmatpush2.bf16.msra.mxu0 0
    %356 = vmatprep.subr.bf16.mxu0 0
    %357 = vmatpush2.bf16.msra.mxu0 0
    %358 = vmatprep.subr.bf16.mxu0 0
    %359 = vmatpush2.bf16.msra.mxu0 0
    %360 = vmatprep.subr.bf16.mxu0 0
    %361 = vmatpush2.bf16.msra.mxu0 0
    %362 = vmatprep.mubr.bf16.mxu0 0
    %363 = vmatmul.mubr.bf16.gmra.mxu0 %v275
    %v364 = vpop.f32.mrf.mxu0
    %v365 = vadd.f32 %v280, %v364
    %v366 = vpop.f32.mrf.mxu0
    %v367 = vpop.f32.mrf.mxu0
    %v368 = vpop.f32.mrf.mxu0
    %369 = vdwg.mxu0
    %370 = vst [vmem:[#allocation10] sm:$0xff] %v365
    // Predicated region
    $region46: #{_forward.1} parent=1 // pred_check
      _
    $region47: #{_forward.1} parent=1 // pred_check_branch
      %372 = sbr.rel (0) target = $region49
    $region48: #{_forward.1} parent=1 // pred_region
      %s374 = ssub.s32 128, 32
      %375 = vsyncadd [#allocation4], %s374
      %s376 = sshll.u32 [#allocation10], 4
      %s377 = int_to_ptr.vmem [resolvable:$true] %s376
      %382 = dma.vmem_to_hbm [thread:$0]  %s377, 32, %s7, [#allocation4], 32, 32, 2
    $region49: #{_forward.1} parent=1 // pred_fallthru
      _
    // Predicated region
    $region50: #{_forward.1} parent=1 // pred_check
      _
    $region51: #{_forward.1} parent=1 // pred_check_branch
      %384 = sbr.rel (0) target = $region53
    $region52: #{_forward.1} parent=1 // pred_region
      %385 = dma.done [#allocation4], 128
    $region53: #{_forward.1} parent=1 // pred_fallthru
      _
    %386 = vsyncpa [#allocation3], 1
    %387 = vsyncpa [#allocation6], 1
    %388 = vsyncpa [#allocation9], 1
    %389 = vsyncpa [#allocation4], 1

// kernel: _forward.1
$region0: #{_forward.1}
  #allocation0 [shape = 'u32[]', space=smem, size = 0x4, offset = 0x4, fixed_abs, tag = 'smem constant byte address 0x4 - core index']
  #allocation1 [shape = 'u32[144,128]{1,0:T(1,128)}', space=vmem, size = 0x12000, scoped, tag = 'internal scratch']
  %s0 = inlined_call_operand.hbm [shape: f32[2,16], index: 0, kind: input, shape index: {}]
  %s1 = inlined_call_operand.hbm [shape: bf16[16,128], index: 1, kind: input, shape index: {}]
  %s2 = inlined_call_operand.vmem [shape: f32[1,128], index: 2, kind: input, shape index: {}]
  %s3 = inlined_call_operand.hbm [shape: bf16[128,128], index: 3, kind: input, shape index: {}]
  %s4 = inlined_call_operand.vmem [shape: f32[1,128], index: 4, kind: input, shape index: {}]
  %s5 = inlined_call_operand.hbm [shape: bf16[128,128], index: 5, kind: input, shape index: {}]
  %s6 = inlined_call_operand.vmem [shape: f32[1,128], index: 6, kind: input, shape index: {}]
  %s7 = inlined_call_operand.hbm [shape: f32[2,128], index: 7, kind: output, shape index: {}]
  %s8 = sld [smem:[#allocation0]]
  $region54: #{_forward.1} parent=0
    _
  %s10 = ssub.s32 1, %s8
  %s11 = scalar_select 0, %s10, %s8
  $region1: #{_forward.1} parent=0
    #allocation2 [shape = 'u8[4096]{0}', space=vmem, size = 0x1000, scoped, tag = 'input window, operand 0, single buffered']
    #allocation3 [shape = 's32[1]{0}', space=sflag, size = 0x4, scoped, tag = 'scoped memory for _forward.1']
    #allocation4 [shape = 's32[1]{0}', space=sflag, size = 0x4, scoped, tag = 'scoped memory for _forward.1']
    #allocation5 [shape = 'u8[4096]{0}', space=vmem, size = 0x1000, scoped, tag = 'input window, operand 1, single buffered']
    #allocation6 [shape = 's32[1]{0}', space=sflag, size = 0x4, scoped, tag = 'scoped memory for _forward.1']
    #allocation7 [shape = 'u8[32768]{0}', space=vmem, size = 0x8000, scoped, tag = 'input window, operand 3, single buffered']
    #allocation8 [shape = 'u8[32768]{0}', space=vmem, size = 0x8000, scoped, tag = 'input window, operand 5, single buffered']
    #allocation9 [shape = 's32[1]{0}', space=sflag, size = 0x4, scoped, tag = 'scoped memory for _forward.1']
    #allocation10 [shape = 'u8[4096]{0}', space=vmem, size = 0x1000, scoped, tag = 'output window, operand 0, single buffered']
    %12 = vsyncpa [#allocation3], 0
    %13 = vsyncpa [#allocation6], 0
    %14 = vsyncpa [#allocation9], 0
    %15 = vsyncpa [#allocation4], 0
    // Predicated region
    $region2: #{_forward.1} parent=1 // pred_check
      _
    $region3: #{_forward.1} parent=1 // pred_check_branch
      %17 = sbr.rel (0) target = $region5
    $region4: #{_forward.1} parent=1 // pred_region
      %s19 = ssub.s32 128, 32
      %20 = vsyncadd [#allocation3], %s19
      %s21 = sshll.u32 [#allocation2], 4
      %s22 = int_to_ptr.vmem [resolvable:$true] %s21
      %27 = dma.hbm_to_vmem [thread:$0]  %s0, 32, %s22, [#allocation3], 32, 32, 2
    $region5: #{_forward.1} parent=1 // pred_fallthru
      _
    // Predicated region
    $region6: #{_forward.1} parent=1 // pred_check
      _
    $region7: #{_forward.1} parent=1 // pred_check_branch
      %29 = sbr.rel (0) target = $region9
    $region8: #{_forward.1} parent=1 // pred_region
      %s31 = ssub.s32 128, 128
      %32 = vsyncadd [#allocation6], %s31
      %s33 = sshll.u32 [#allocation5], 4
      %s34 = int_to_ptr.vmem [resolvable:$true] %s33
      %39 = dma.hbm_to_vmem [thread:$0]  %s1, 128, %s34, [#allocation6], 64, 64, 4
    $region9: #{_forward.1} parent=1 // pred_fallthru
      _
    // Predicated region
    $region10: #{_forward.1} parent=1 // pred_check
      _
    $region11: #{_forward.1} parent=1 // pred_check_branch
      %41 = sbr.rel (0) target = $region13
    $region12: #{_forward.1} parent=1 // pred_region
      _
    $region13: #{_forward.1} parent=1 // pred_fallthru
      _
    // Predicated region
    $region14: #{_forward.1} parent=1 // pred_check
      _
    $region15: #{_forward.1} parent=1 // pred_check_branch
      %43 = sbr.rel (0) target = $region17
    $region16: #{_forward.1} parent=1 // pred_region
      %s45 = ssub.s32 1024, 1024
      %46 = vsyncadd [#allocation6], %s45
      %s47 = sshll.u32 [#allocation7], 4
      %s48 = int_to_ptr.vmem [resolvable:$true] %s47
      %53 = dma.hbm_to_vmem [thread:$0]  %s3, 1024, %s48, [#allocation6], 64, 64, 4
    $region17: #{_forward.1} parent=1 // pred_fallthru
      _
    // Predicated region
    $region18: #{_forward.1} parent=1 // pred_check
      _
    $region19: #{_forward.1} parent=1 // pred_check_branch
      %55 = sbr.rel (0) target = $region21
    $region20: #{_forward.1} parent=1 // pred_region
      _
    $region21: #{_forward.1} parent=1 // pred_fallthru
      _
    // Predicated region
    $region22: #{_forward.1} parent=1 // pred_check
      _
    $region23: #{_forward.1} parent=1 // pred_check_branch
      %57 = sbr.rel (0) target = $region25
    $region24: #{_forward.1} parent=1 // pred_region
      %s59 = ssub.s32 1024, 1024
      %60 = vsyncadd [#allocation9], %s59
      %s61 = sshll.u32 [#allocation8], 4
      %s62 = int_to_ptr.vmem [resolvable:$true] %s61
      %67 = dma.hbm_to_vmem [thread:$0]  %s5, 1024, %s62, [#allocation9], 64, 64, 4
    $region25: #{_forward.1} parent=1 // pred_fallthru
      _
    // Predicated region
    $region26: #{_forward.1} parent=1 // pred_check
      _
    $region27: #{_forward.1} parent=1 // pred_check_branch
      %69 = sbr.rel (0) target = $region29
    $region28: #{_forward.1} parent=1 // pred_region
      _
    $region29: #{_forward.1} parent=1 // pred_fallthru
      _
    // Predicated region
    $region30: #{_forward.1} parent=1 // pred_check
      _
    $region31: #{_forward.1} parent=1 // pred_check_branch
      %71 = sbr.rel (0) target = $region33
    $region32: #{_forward.1} parent=1 // pred_region
      %72 = dma.done [#allocation3], 128
    $region33: #{_forward.1} parent=1 // pred_fallthru
      _
    // Predicated region
    $region34: #{_forward.1} parent=1 // pred_check
      _
    $region35: #{_forward.1} parent=1 // pred_check_branch
      %74 = sbr.rel (0) target = $region37
    $region36: #{_forward.1} parent=1 // pred_region
      %75 = dma.done [#allocation6], 128
    $region37: #{_forward.1} parent=1 // pred_fallthru
      _
    // Predicated region
    $region38: #{_forward.1} parent=1 // pred_check
      _
    $region39: #{_forward.1} parent=1 // pred_check_branch
      %77 = sbr.rel (0) target = $region41
    $region40: #{_forward.1} parent=1 // pred_region
      %78 = dma.done [#allocation6], 1024
    $region41: #{_forward.1} parent=1 // pred_fallthru
      _
    // Predicated region
    $region42: #{_forward.1} parent=1 // pred_check
      _
    $region43: #{_forward.1} parent=1 // pred_check_branch
      %80 = sbr.rel (0) target = $region45
    $region44: #{_forward.1} parent=1 // pred_region
      %81 = dma.done [#allocation9], 1024
    $region45: #{_forward.1} parent=1 // pred_fallthru
      _
    %v83 = vld [vmem:[#allocation2] sm:$0xff]
    %v84 = vld [vmem:[#allocation5] sm:$0xf]
    %v85 = vld [vmem:[#allocation5 + $0x4] sm:$0xf]
    %v86 = vld [vmem:[%s2] sm:$0x1]
    %v87 = vpack.c.bf16 %v83, %v83
    %v89 = vlaneseq
    %v90 = vshrl.u32 %v89, 7
    %v91 = vsub.s32 0, %v90
    %v92 = vrot.slane %v86, %v91
    %v96 = vunpack.c.l.b16 %v84
    %v97 = vunpack.c.l.b16 %v85
    %v98 = vpack.c.b16 %v97, %v96
    %vm100 = vcmask 130048
    %v102 = vsel %vm100, %v87, 0
    %104 = vmatprep.subr.bf16.mxu0 0
    %105 = vmatpush1.bf16.msra.mxu0 0
    %106 = vmatprep.subr.bf16.mxu0 0
    %107 = vmatpush1.bf16.msra.mxu0 0
    %108 = vmatprep.subr.bf16.mxu0 0
    %109 = vmatpush1.bf16.msra.mxu0 0
    %110 = vmatprep.subr.bf16.mxu0 0
    %111 = vmatpush1.bf16.msra.mxu0 0
    %112 = vmatprep.subr.bf16.mxu0 0
    %113 = vmatpush1.bf16.msra.mxu0 0
    %114 = vmatprep.subr.bf16.mxu0 0
    %115 = vmatpush1.bf16.msra.mxu0 0
    %116 = vmatprep.subr.bf16.mxu0 0
    %117 = vmatpush1.bf16.msra.mxu0 0
    %118 = vmatprep.subr.bf16.mxu0 0
    %119 = vmatpush1.bf16.msra.mxu0 %v98
    %120 = vmatprep.subr.bf16.mxu0 0
    %121 = vmatpush2.bf16.msra.mxu0 0
    %122 = vmatprep.subr.bf16.mxu0 0
    %123 = vmatpush2.bf16.msra.mxu0 0
    %124 = vmatprep.subr.bf16.mxu0 0
    %125 = vmatpush2.bf16.msra.mxu0 0
    %126 = vmatprep.subr.bf16.mxu0 0
    %127 = vmatpush2.bf16.msra.mxu0 0
    %128 = vmatprep.subr.bf16.mxu0 0
    %129 = vmatpush2.bf16.msra.mxu0 0
    %130 = vmatprep.subr.bf16.mxu0 0
    %131 = vmatpush2.bf16.msra.mxu0 0
    %132 = vmatprep.subr.bf16.mxu0 0
    %133 = vmatpush2.bf16.msra.mxu0 0
    %134 = vmatprep.subr.bf16.mxu0 0
    %135 = vmatpush2.bf16.msra.mxu0 0
    %136 = vmatprep.mubr.bf16.mxu0 0
    %137 = vmatmul.mubr.bf16.gmra.mxu0 %v102
    %v138 = vpop.f32.mrf.mxu0
    %v139 = vadd.f32 %v92, %v138
    %v140 = vpop.f32.mrf.mxu0
    %v141 = vpop.f32.mrf.mxu0
    %v142 = vpop.f32.mrf.mxu0
    %143 = vdwg.mxu0
    %v144 = vmax.f32 %v139, 0.0
    %v145 = vld [vmem:[#allocation7] sm:$0xf]
    %v146 = vld [vmem:[#allocation7 + $0x4] sm:$0xf]
    %v147 = vld [vmem:[#allocation7 + $0x8] sm:$0xf]
    %v148 = vld [vmem:[#allocation7 + $0xc] sm:$0xf]
    %v149 = vld [vmem:[#allocation7 + $0x10] sm:$0xf]
    %v150 = vld [vmem:[#allocation7 + $0x14] sm:$0xf]
    %v151 = vld [vmem:[#allocation7 + $0x18] sm:$0xf]
    %v152 = vld [vmem:[#allocation7 + $0x1c] sm:$0xf]
    %v153 = vld [vmem:[#allocation7 + $0x20] sm:$0xf]
    %v154 = vld [vmem:[#allocation7 + $0x24] sm:$0xf]
    %v155 = vld [vmem:[#allocation7 + $0x28] sm:$0xf]
    %v156 = vld [vmem:[#allocation7 + $0x2c] sm:$0xf]
    %v157 = vld [vmem:[#allocation7 + $0x30] sm:$0xf]
    %v158 = vld [vmem:[#allocation7 + $0x34] sm:$0xf]
    %v159 = vld [vmem:[#allocation7 + $0x38] sm:$0xf]
    %v160 = vld [vmem:[#allocation7 + $0x3c] sm:$0xf]
    %v161 = vld [vmem:[%s4] sm:$0x1]
    %v162 = vpack.c.bf16 %v144, %v144
    %v164 = vlaneseq
    %v165 = vshrl.u32 %v164, 7
    %v166 = vsub.s32 0, %v165
    %v167 = vrot.slane %v161, %v166
    %v185 = vunpack.c.l.b16 %v145
    %v186 = vunpack.c.l.b16 %v146
    %v187 = vunpack.c.l.b16 %v147
    %v188 = vunpack.c.l.b16 %v148
    %v189 = vunpack.c.l.b16 %v149
    %v190 = vunpack.c.l.b16 %v150
    %v191 = vunpack.c.l.b16 %v151
    %v192 = vunpack.c.l.b16 %v152
    %v193 = vunpack.c.l.b16 %v153
    %v194 = vunpack.c.l.b16 %v154
    %v195 = vunpack.c.l.b16 %v155
    %v196 = vunpack.c.l.b16 %v156
    %v197 = vunpack.c.l.b16 %v157
    %v198 = vunpack.c.l.b16 %v158
    %v199 = vunpack.c.l.b16 %v159
    %v200 = vunpack.c.l.b16 %v160
    %v201 = vpack.c.b16 %v186, %v185
    %v202 = vpack.c.b16 %v188, %v187
    %v203 = vpack.c.b16 %v190, %v189
    %v204 = vpack.c.b16 %v192, %v191
    %v205 = vpack.c.b16 %v194, %v193
    %v206 = vpack.c.b16 %v196, %v195
    %v207 = vpack.c.b16 %v198, %v197
    %v208 = vpack.c.b16 %v200, %v199
    %217 = vmatprep.subr.bf16.mxu0 0
    %218 = vmatpush1.bf16.msra.mxu0 %v208
    %219 = vmatprep.subr.bf16.mxu0 0
    %220 = vmatpush1.bf16.msra.mxu0 %v207
    %221 = vmatprep.subr.bf16.mxu0 0
    %222 = vmatpush1.bf16.msra.mxu0 %v206
    %223 = vmatprep.subr.bf16.mxu0 0
    %224 = vmatpush1.bf16.msra.mxu0 %v205
    %225 = vmatprep.subr.bf16.mxu0 0
    %226 = vmatpush1.bf16.msra.mxu0 %v204
    %227 = vmatprep.subr.bf16.mxu0 0
    %228 = vmatpush1.bf16.msra.mxu0 %v203
    %229 = vmatprep.subr.bf16.mxu0 0
    %230 = vmatpush1.bf16.msra.mxu0 %v202
    %231 = vmatprep.subr.bf16.mxu0 0
    %232 = vmatpush1.bf16.msra.mxu0 %v201
    %233 = vmatprep.subr.bf16.mxu0 0
    %234 = vmatpush2.bf16.msra.mxu0 0
    %235 = vmatprep.subr.bf16.mxu0 0
    %236 = vmatpush2.bf16.msra.mxu0 0
    %237 = vmatprep.subr.bf16.mxu0 0
    %238 = vmatpush2.bf16.msra.mxu0 0
    %239 = vmatprep.subr.bf16.mxu0 0
    %240 = vmatpush2.bf16.msra.mxu0 0
    %241 = vmatprep.subr.bf16.mxu0 0
    %242 = vmatpush2.bf16.msra.mxu0 0
    %243 = vmatprep.subr.bf16.mxu0 0
    %244 = vmatpush2.bf16.msra.mxu0 0
    %245 = vmatprep.subr.bf16.mxu0 0
    %246 = vmatpush2.bf16.msra.mxu0 0
    %247 = vmatprep.subr.bf16.mxu0 0
    %248 = vmatpush2.bf16.msra.mxu0 0
    %249 = vmatprep.mubr.bf16.mxu0 0
    %250 = vmatmul.mubr.bf16.gmra.mxu0 %v162
    %v251 = vpop.f32.mrf.mxu0
    %v252 = vadd.f32 %v167, %v251
    %v253 = vpop.f32.mrf.mxu0
    %v254 = vpop.f32.mrf.mxu0
    %v255 = vpop.f32.mrf.mxu0
    %256 = vdwg.mxu0
    %v257 = vmax.f32 %v252, 0.0
    %v258 = vld [vmem:[#allocation8] sm:$0xf]
    %v259 = vld [vmem:[#allocation8 + $0x4] sm:$0xf]
    %v260 = vld [vmem:[#allocation8 + $0x8] sm:$0xf]
    %v261 = vld [vmem:[#allocation8 + $0xc] sm:$0xf]
    %v262 = vld [vmem:[#allocation8 + $0x10] sm:$0xf]
    %v263 = vld [vmem:[#allocation8 + $0x14] sm:$0xf]
    %v264 = vld [vmem:[#allocation8 + $0x18] sm:$0xf]
    %v265 = vld [vmem:[#allocation8 + $0x1c] sm:$0xf]
    %v266 = vld [vmem:[#allocation8 + $0x20] sm:$0xf]
    %v267 = vld [vmem:[#allocation8 + $0x24] sm:$0xf]
    %v268 = vld [vmem:[#allocation8 + $0x28] sm:$0xf]
    %v269 = vld [vmem:[#allocation8 + $0x2c] sm:$0xf]
    %v270 = vld [vmem:[#allocation8 + $0x30] sm:$0xf]
    %v271 = vld [vmem:[#allocation8 + $0x34] sm:$0xf]
    %v272 = vld [vmem:[#allocation8 + $0x38] sm:$0xf]
    %v273 = vld [vmem:[#allocation8 + $0x3c] sm:$0xf]
    %v274 = vld [vmem:[%s6] sm:$0x1]
    %v275 = vpack.c.bf16 %v257, %v257
    %v277 = vlaneseq
    %v278 = vshrl.u32 %v277, 7
    %v279 = vsub.s32 0, %v278
    %v280 = vrot.slane %v274, %v279
    %v298 = vunpack.c.l.b16 %v258
    %v299 = vunpack.c.l.b16 %v259
    %v300 = vunpack.c.l.b16 %v260
    %v301 = vunpack.c.l.b16 %v261
    %v302 = vunpack.c.l.b16 %v262
    %v303 = vunpack.c.l.b16 %v263
    %v304 = vunpack.c.l.b16 %v264
    %v305 = vunpack.c.l.b16 %v265
    %v306 = vunpack.c.l.b16 %v266
    %v307 = vunpack.c.l.b16 %v267
    %v308 = vunpack.c.l.b16 %v268
    %v309 = vunpack.c.l.b16 %v269
    %v310 = vunpack.c.l.b16 %v270
    %v311 = vunpack.c.l.b16 %v271
    %v312 = vunpack.c.l.b16 %v272
    %v313 = vunpack.c.l.b16 %v273
    %v314 = vpack.c.b16 %v299, %v298
    %v315 = vpack.c.b16 %v301, %v300
    %v316 = vpack.c.b16 %v303, %v302
    %v317 = vpack.c.b16 %v305, %v304
    %v318 = vpack.c.b16 %v307, %v306
    %v319 = vpack.c.b16 %v309, %v308
    %v320 = vpack.c.b16 %v311, %v310
    %v321 = vpack.c.b16 %v313, %v312
    %330 = vmatprep.subr.bf16.mxu0 0
    %331 = vmatpush1.bf16.msra.mxu0 %v321
    %332 = vmatprep.subr.bf16.mxu0 0
    %333 = vmatpush1.bf16.msra.mxu0 %v320
    %334 = vmatprep.subr.bf16.mxu0 0
    %335 = vmatpush1.bf16.msra.mxu0 %v319
    %336 = vmatprep.subr.bf16.mxu0 0
    %337 = vmatpush1.bf16.msra.mxu0 %v318
    %338 = vmatprep.subr.bf16.mxu0 0
    %339 = vmatpush1.bf16.msra.mxu0 %v317
    %340 = vmatprep.subr.bf16.mxu0 0
    %341 = vmatpush1.bf16.msra.mxu0 %v316
    %342 = vmatprep.subr.bf16.mxu0 0
    %343 = vmatpush1.bf16.msra.mxu0 %v315
    %344 = vmatprep.subr.bf16.mxu0 0
    %345 = vmatpush1.bf16.msra.mxu0 %v314
    %346 = vmatprep.subr.bf16.mxu0 0
    %347 = vmatpush2.bf16.msra.mxu0 0
    %348 = vmatprep.subr.bf16.mxu0 0
    %349 = vmatpush2.bf16.msra.mxu0 0
    %350 = vmatprep.subr.bf16.mxu0 0
    %351 = vmatpush2.bf16.msra.mxu0 0
    %352 = vmatprep.subr.bf16.mxu0 0
    %353 = vmatpush2.bf16.msra.mxu0 0
    %354 = vmatprep.subr.bf16.mxu0 0
    %355 = vmatpush2.bf16.msra.mxu0 0
    %356 = vmatprep.subr.bf16.mxu0 0
    %357 = vmatpush2.bf16.msra.mxu0 0
    %358 = vmatprep.subr.bf16.mxu0 0
    %359 = vmatpush2.bf16.msra.mxu0 0
    %360 = vmatprep.subr.bf16.mxu0 0
    %361 = vmatpush2.bf16.msra.mxu0 0
    %362 = vmatprep.mubr.bf16.mxu0 0
    %363 = vmatmul.mubr.bf16.gmra.mxu0 %v275
    %v364 = vpop.f32.mrf.mxu0
    %v365 = vadd.f32 %v280, %v364
    %v366 = vpop.f32.mrf.mxu0
    %v367 = vpop.f32.mrf.mxu0
    %v368 = vpop.f32.mrf.mxu0
    %369 = vdwg.mxu0
    %370 = vst [vmem:[#allocation10] sm:$0xff] %v365
    // Predicated region
    $region46: #{_forward.1} parent=1 // pred_check
      _
    $region47: #{_forward.1} parent=1 // pred_check_branch
      %372 = sbr.rel (0) target = $region49
    $region48: #{_forward.1} parent=1 // pred_region
      %s374 = ssub.s32 128, 32
      %375 = vsyncadd [#allocation4], %s374
      %s376 = sshll.u32 [#allocation10], 4
      %s377 = int_to_ptr.vmem [resolvable:$true] %s376
      %382 = dma.vmem_to_hbm [thread:$0]  %s377, 32, %s7, [#allocation4], 32, 32, 2
    $region49: #{_forward.1} parent=1 // pred_fallthru
      _
    // Predicated region
    $region50: #{_forward.1} parent=1 // pred_check
      _
    $region51: #{_forward.1} parent=1 // pred_check_branch
      %384 = sbr.rel (0) target = $region53
    $region52: #{_forward.1} parent=1 // pred_region
      %385 = dma.done [#allocation4], 128
    $region53: #{_forward.1} parent=1 // pred_fallthru
      _
    %386 = vsyncpa [#allocation3], 1
    %387 = vsyncpa [#allocation6], 1
    %388 = vsyncpa [#allocation9], 1
    %389 = vsyncpa [#allocation4], 1

</llo_original>
